<compile_context>
chip_gen: v5e
topology: v5e:2x2
jax: 0.10.0
libtpu: 0.0.40
codegen_flags: <defaults>
</compile_context>

<pallas_src>
import math
import numpy as np

import jax
import jax.numpy as jnp
from jax import lax
from jax.experimental import pallas as pl
from jax.experimental.pallas import tpu as pltpu


# mirrors the global config the PyTorch file reads
config_params = {"train_params": {"IOU_loss_thre": 0.5}}

_LANE = 128


def _round_up(x, m):
    return ((x + m - 1) // m) * m


def _pick_hw_tile(hw_pad):
    for t in (2048, 1024, 512, 256):
        if hw_pad % t == 0:
            return t
    return _LANE                     # hw_pad is always a multiple of 128


def _pick_batch_tile(bs, rows, hw_tile, budget_bytes=2 << 20):
    per_batch = max(rows * hw_tile * 4, 1)
    bt = max(1, min(bs, budget_bytes // per_batch))
    while bs % bt:
        bt -= 1
    return bt


# ----------------------------------------------------------------------------
# Pallas kernels
# ----------------------------------------------------------------------------
def _decode_kernel(p_ref, offs_ref, scale_ref, isexp_ref, out_ref):
    """Whole-slab box decode: out = select(isexp, exp(p), sigmoid(p)+offs) * scale."""
    p = p_ref[...]                        # (bt, R, HWT) raw logits
    offs = offs_ref[...]                  # (R, HWT)  grid_x / grid_y / 0 per row
    scale = scale_ref[...]                # (R, 1)    stride / anchor*stride / 1
    isexp = isexp_ref[...]                # (R, 1)    1.0 on w/h rows
    dec = jnp.where(isexp > 0.5, jnp.exp(p), jax.nn.sigmoid(p) + offs)
    out_ref[...] = dec * scale            # single lane-dense full-block store


def _make_loss_kernel(num_anchors, num_classes):
    A, C = num_anchors, num_classes

    def kernel(p_ref, t_ref, sums_ref):
        # p rows: [x(A), y(A), w(A), h(A), conf(A), cls(A*C, anchor-major)]
        # t rows: [tx(A), ty(A), tw(A), th(A), mask(A), noobj(A), cls_idx(A)]
        p = p_ref[...]
        t = t_ref[...]

        m = t[:, 4 * A:5 * A, :]
        nm = t[:, 5 * A:6 * A, :]
        ci = t[:, 6 * A:7 * A, :]

        zx, tx = p[:, 0 * A:1 * A, :], t[:, 0 * A:1 * A, :]
        zy, ty = p[:, 1 * A:2 * A, :], t[:, 1 * A:2 * A, :]
        zw, tw = p[:, 2 * A:3 * A, :], t[:, 2 * A:3 * A, :]
        zh, th = p[:, 3 * A:4 * A, :], t[:, 3 * A:4 * A, :]
        zc = p[:, 4 * A:5 * A, :]

        # sum of BCE(sigmoid(z)*m, tgt*m) over a {0,1} mask == sum(m*(softplus(z)-tgt*z))
        sums_ref[0, 0] = jnp.sum(m * (jax.nn.softplus(zx) - tx * zx))
        sums_ref[0, 1] = jnp.sum(m * (jax.nn.softplus(zy) - ty * zy))
        sums_ref[0, 2] = jnp.sum(m * jnp.square(zw - tw))
        sums_ref[0, 3] = jnp.sum(m * jnp.square(zh - th))
        spc = jax.nn.softplus(zc)
        sums_ref[0, 4] = jnp.sum(m * (spc - zc))      # BCE(conf, 1) on positives
        sums_ref[0, 5] = jnp.sum(nm * spc)            # BCE(conf, 0) on no-object cells
        sums_ref[0, 7] = jnp.sum(m)

        # class loss: sum_c m*(softplus(z_c) - onehot_c*z_c); the one-hot is
        # rebuilt in-kernel from the class-index map (no one-hot HBM traffic).
        hwt = p.shape[-1]
        s6 = jnp.float32(0.0)
        for a in range(A):
            za = p[:, 5 * A + a * C:5 * A + (a + 1) * C, :]      # (bt, C, HWT)
            ma = m[:, a:a + 1, :]
            ca = ci[:, a:a + 1, :].astype(jnp.int32)             # -1 off-mask
            cls_id = lax.broadcasted_iota(jnp.int32, (1, C, hwt), 1)
            onehot = (cls_id == ca).astype(jnp.float32)
            s6 = s6 + jnp.sum(ma * jax.nn.softplus(za) - onehot * za)
        sums_ref[0, 6] = s6

    return kernel


def _decode_row_constants(num_anchors, bbox_attrs, in_w, hw, hw_pad,
                          stride_w, stride_h, scaled_anchors):
    """Per-row decode constants, passed to the kernel as inputs."""
    R = num_anchors * bbox_attrs
    offs = np.zeros((R, hw_pad), np.float32)
    scale = np.ones((R, 1), np.float32)
    isexp = np.zeros((R, 1), np.float32)
    col = np.arange(hw, dtype=np.float32)
    gx = col % in_w
    gy = np.floor(col / in_w)
    for a in range(num_anchors):
        base = a * bbox_attrs
        offs[base + 0, :hw] = gx
        offs[base + 1, :hw] = gy
        scale[base + 0, 0] = stride_w
        scale[base + 1, 0] = stride_h
        scale[base + 2, 0] = scaled_anchors[a][0] * stride_w
        scale[base + 3, 0] = scaled_anchors[a][1] * stride_h
        isexp[base + 2, 0] = 1.0
        isexp[base + 3, 0] = 1.0
    return jnp.asarray(offs), jnp.asarray(scale), jnp.asarray(isexp)


# ----------------------------------------------------------------------------
# Module wrapper (mirrors torch YOLOLossV3.forward)
# ----------------------------------------------------------------------------
class YOLOLossV3:
    def __init__(self, anchors, num_classes, input_shape):
        self.anchors = anchors
        self.num_anchors = len(anchors)
        self.num_classes = num_classes
        self.bbox_attrs = 5 + num_classes
        self.input_shape = input_shape
        self.ignore_threshold = config_params["train_params"]["IOU_loss_thre"]
        self.lambda_xy = 2.5
        self.lambda_wh = 2.5
        self.lambda_conf = 1.0
        self.lambda_cls = 1.0

    def forward(self, input, targets=None):
        bs, _, in_h, in_w = input.shape
        A, C, attrs = self.num_anchors, self.num_classes, self.bbox_attrs
        HW = in_h * in_w
        HW_pad = _round_up(HW, _LANE)
        stride_h = self.input_shape[0] / in_h
        stride_w = self.input_shape[1] / in_w
        scaled_anchors = [(a_w / stride_w, a_h / stride_h) for a_w, a_h in self.anchors]

        x32 = jnp.asarray(input, jnp.float32)

        if targets is not None:
            # --- regroup pred channels attribute-major, lane-dense in HW ----
            p5 = x32.reshape(bs, A, attrs, HW)
            pbox = p5[:, :, :5, :].transpose(0, 2, 1, 3).reshape(bs, 5 * A, HW)
            pcls = p5[:, :, 5:, :].reshape(bs, A * C, HW)
            pred_re = jnp.concatenate([pbox, pcls], axis=1)          # (bs, 5A+AC, HW)
            pred_re = jnp.pad(pred_re, ((0, 0), (0, 0), (0, HW_pad - HW)))

            mask, noobj_mask, tx, ty, tw, th, tconf, tcls = self.get_target(
                targets, scaled_anchors, in_w, in_h, self.ignore_threshold)

            # class-index map (-1 where no positive cell).
            # TODO(synk): if two gt boxes hit the same anchor/cell with different
            # classes PyTorch's one-hot keeps both; a single index keeps only one.
            cls_idx = np.where(tcls.sum(-1) > 0, np.argmax(tcls, -1),
                               -1.0).astype(np.float32)

            def r(a_np):
                return a_np.reshape(bs, A, HW).astype(np.float32)

            tgt = np.concatenate([r(tx), r(ty), r(tw), r(th),
                                  r(mask), r(noobj_mask), r(cls_idx)], axis=1)
            tgt = np.pad(tgt, ((0, 0), (0, 0), (0, HW_pad - HW)))     # zeros in pad
            tgt = jnp.asarray(tgt)

            rows_p = 5 * A + A * C
            rows_t = 7 * A
            hwt = _pick_hw_tile(HW_pad)
            bt = _pick_batch_tile(bs, max(rows_p, rows_t), hwt)
            n_b = bs // bt
            n_t = HW_pad // hwt

            kernel = _make_loss_kernel(A, C)
            partials = pl.pallas_call(
                kernel,
                out_shape=jax.ShapeDtypeStruct((n_b * n_t, 8), jnp.float32),
                grid=(n_b, n_t),
                in_specs=[
                    pl.BlockSpec((bt, rows_p, hwt), lambda b, t: (b, 0, t)),
                    pl.BlockSpec((bt, rows_t, hwt), lambda b, t: (b, 0, t)),
                ],
                out_specs=pl.BlockSpec((1, 8), lambda b, t: (b * n_t + t, 0),
                                       memory_space=pltpu.MemorySpace.SMEM),
                compiler_params=pltpu.CompilerParams(
                    dimension_semantics=("parallel", "parallel")),
            )(pred_re, tgt)

            sums = partials.sum(axis=0)
            n_elem = bs * A * HW
            loss_x = sums[0] / n_elem
            loss_y = sums[1] / n_elem
            loss_w = sums[2] / n_elem
            loss_h = sums[3] / n_elem
            loss_conf = sums[4] / n_elem + 0.5 * sums[5] / n_elem
            loss_cls = sums[6] / (jnp.maximum(sums[7], 1.0) * C)
            loss = (loss_x * self.lambda_xy + loss_y * self.lambda_xy
                    + loss_w * self.lambda_wh + loss_h * self.lambda_wh
                    + loss_conf * self.lambda_conf + loss_cls * self.lambda_cls)
            return (loss, float(loss_x), float(loss_y), float(loss_w),
                    float(loss_h), float(loss_conf), float(loss_cls))
        else:
            R = A * attrs
            pred = x32.reshape(bs, R, HW)                             # free view of NCHW
            pred = jnp.pad(pred, ((0, 0), (0, 0), (0, HW_pad - HW)))
            offs, scale, isexp = _decode_row_constants(
                A, attrs, in_w, HW, HW_pad, stride_w, stride_h, scaled_anchors)

            hwt = _pick_hw_tile(HW_pad)
            bt = _pick_batch_tile(bs, R, hwt)
            n_b = bs // bt
            n_t = HW_pad // hwt

            out = pl.pallas_call(
                _decode_kernel,
                out_shape=jax.ShapeDtypeStruct((bs, R, HW_pad), jnp.float32),
                grid=(n_b, n_t),
                in_specs=[
                    pl.BlockSpec((bt, R, hwt), lambda b, t: (b, 0, t)),
                    pl.BlockSpec((R, hwt), lambda b, t: (0, t)),
                    pl.BlockSpec((R, 1), lambda b, t: (0, 0)),
                    pl.BlockSpec((R, 1), lambda b, t: (0, 0)),
                ],
                out_specs=pl.BlockSpec((bt, R, hwt), lambda b, t: (b, 0, t)),
                compiler_params=pltpu.CompilerParams(
                    dimension_semantics=("parallel", "parallel")),
            )(pred, offs, scale, isexp)

            # (bs, A*attrs, HW_pad) -> (bs, A*HW, attrs)  (torch .view(bs,-1,attrs) order)
            out = out[:, :, :HW].reshape(bs, A, attrs, HW)
            return out.transpose(0, 1, 3, 2).reshape(bs, A * HW, attrs)

    def get_target(self, target, anchors, in_w, in_h, ignore_threshold):
        # TODO(synk): per-box target assignment (python loops + argmax over
        # anchor IoUs, scatter into grid cells) is data-dependent scalar work
        # with no clean Pallas equivalent; computed on host in numpy.
        target = np.asarray(target, np.float32)
        anchors_np = np.asarray(anchors, np.float32)
        bs = target.shape[0]
        A, C = self.num_anchors, self.num_classes
        mask = np.zeros((bs, A, in_h, in_w), np.float32)
        noobj_mask = np.ones((bs, A, in_h, in_w), np.float32)
        tx = np.zeros((bs, A, in_h, in_w), np.float32)
        ty = np.zeros((bs, A, in_h, in_w), np.float32)
        tw = np.zeros((bs, A, in_h, in_w), np.float32)
        th = np.zeros((bs, A, in_h, in_w), np.float32)
        tconf = np.zeros((bs, A, in_h, in_w), np.float32)
        tcls = np.zeros((bs, A, in_h, in_w, C), np.float32)
        for b in range(bs):
            for t in range(target.shape[1]):
                if target[b, t, 5] < 1:
                    break
                gx = target[b, t, 0] * in_w
                gy = target[b, t, 1] * in_h
                gw = target[b, t, 2] * in_w
                gh = target[b, t, 3] * in_h
                if gw <= 0 or gh <= 0:
                    continue
                gi = int(gx)
                gj = int(gy)
                inter = np.minimum(gw, anchors_np[:, 0]) * np.minimum(gh, anchors_np[:, 1])
                union = gw * gh + anchors_np[:, 0] * anchors_np[:, 1] - inter
                anch_ious = inter / (union + 1e-16)
                noobj_mask[b, anch_ious > ignore_threshold, gj, gi] = 0
                best_n = int(np.argmax(anch_ious))
                mask[b, best_n, gj, gi] = 1
                tx[b, best_n, gj, gi] = gx - gi
                ty[b, best_n, gj, gi] = gy - gj
                tw[b, best_n, gj, gi] = math.log(gw / anchors_np[best_n, 0] + 1e-16)
                th[b, best_n, gj, gi] = math.log(gh / anchors_np[best_n, 1] + 1e-16)
                tconf[b, best_n, gj, gi] = 1
                tcls[b, best_n, gj, gi, int(target[b, t, 4])] = 1
        return mask, noobj_mask, tx, ty, tw, th, tconf, tcls


# ----------------------------------------------------------------------------
# Pure numpy references (for self-check only)
# ----------------------------------------------------------------------------
def _sig(z):
    return 1.0 / (1.0 + np.exp(-z))


def _bce_elem_np(p, t):
    lp = np.maximum(np.log(np.maximum(p, 1e-45)), -100.0)
    l1 = np.maximum(np.log(np.maximum(1.0 - p, 1e-45)), -100.0)
    return -(t * lp + (1.0 - t) * l1)


def _decode_reference(x_np, module):
    bs, _, in_h, in_w = x_np.shape
    A, C = module.num_anchors, module.num_classes
    stride_h = module.input_shape[0] / in_h
    stride_w = module.input_shape[1] / in_w
    sa = np.array([(aw / stride_w, ah / stride_h) for aw, ah in module.anchors],
                  np.float32)
    pred = x_np.reshape(bs, A, module.bbox_attrs, in_h, in_w).transpose(0, 1, 3, 4, 2)
    x = _sig(pred[..., 0]); y = _sig(pred[..., 1])
    w = pred[..., 2]; h = pred[..., 3]
    conf = _sig(pred[..., 4]); cls = _sig(pred[..., 5:])
    grid_x = np.tile(np.arange(in_w, dtype=np.float32), (bs, A, in_h, 1))
    grid_y = np.tile(np.arange(in_h, dtype=np.float32),
                     (bs, A, in_w, 1)).transpose(0, 1, 3, 2)
    aw = sa[:, 0].reshape(1, A, 1, 1)
    ah = sa[:, 1].reshape(1, A, 1, 1)
    boxes = np.zeros(pred[..., :4].shape, np.float32)
    boxes[..., 0] = x + grid_x
    boxes[..., 1] = y + grid_y
    boxes[..., 2] = np.exp(w) * aw
    boxes[..., 3] = np.exp(h) * ah
    scale = np.array([stride_w, stride_h, stride_w, stride_h], np.float32)
    return np.concatenate([boxes.reshape(bs, -1, 4) * scale,
                           conf.reshape(bs, -1, 1),
                           cls.reshape(bs, -1, C)], axis=-1)


def _loss_reference(x_np, targets_np, module):
    bs, _, in_h, in_w = x_np.shape
    A, C = module.num_anchors, module.num_classes
    stride_h = module.input_shape[0] / in_h
    stride_w = module.input_shape[1] / in_w
    scaled = [(aw / stride_w, ah / stride_h) for aw, ah in module.anchors]
    pred = x_np.reshape(bs, A, module.bbox_attrs, in_h, in_w).transpose(0, 1, 3, 4, 2)
    x = _sig(pred[..., 0]); y = _sig(pred[..., 1])
    w = pred[..., 2]; h = pred[..., 3]
    conf = _sig(pred[..., 4]); cls = _sig(pred[..., 5:])
    mask, noobj, tx, ty, tw, th, tconf, tcls = module.get_target(
        targets_np, scaled, in_w, in_h, module.ignore_threshold)
    bce_mean = lambda p, t: float(np.mean(_bce_elem_np(p, t)))
    loss_x = bce_mean(x * mask, tx * mask)
    loss_y = bce_mean(y * mask, ty * mask)
    loss_w = float(np.mean((w * mask - tw * mask) ** 2))
    loss_h = float(np.mean((h * mask - th * mask) ** 2))
    loss_conf = bce_mean(conf * mask, mask) + 0.5 * bce_mean(conf * noobj, noobj * 0.0)
    sel = mask == 1
    loss_cls = bce_mean(cls[sel], tcls[sel])
    loss = (loss_x * module.lambda_xy + loss_y * module.lambda_xy
            + loss_w * module.lambda_wh + loss_h * module.lambda_wh
            + loss_conf * module.lambda_conf + loss_cls * module.lambda_cls)
    return loss, (loss_x, loss_y, loss_w, loss_h, loss_conf, loss_cls)


# ----------------------------------------------------------------------------
if __name__ == "__main__":
    anchors = [(10.0, 13.0), (16.0, 30.0), (33.0, 23.0)]
    num_classes = 4
    input_shape = (64.0, 64.0)          # network input H, W
    bs, in_h, in_w = 2, 8, 8
    c_in = len(anchors) * (5 + num_classes)   # 27

    module = YOLOLossV3(anchors, num_classes, input_shape)

    key = jax.random.PRNGKey(0)
    x = jax.random.normal(key, (bs, c_in, in_h, in_w), jnp.float32)

    # deterministic targets: (cx, cy, w, h, class, valid) normalized to [0,1]
    targets = np.zeros((bs, 3, 6), np.float32)
    targets[0, 0] = [0.30, 0.40, 0.20, 0.30, 1.0, 1.0]
    targets[0, 1] = [0.70, 0.60, 0.40, 0.25, 3.0, 1.0]
    targets[1, 0] = [0.55, 0.25, 0.15, 0.50, 0.0, 1.0]

    # --- inference branch (targets=None): box decode kernel -----------------
    out = module.forward(x, targets=None)
    out = jax.block_until_ready(out)
    out_ref = _decode_reference(np.asarray(x), module)
    assert out.shape == (bs, len(anchors) * in_h * in_w, 5 + num_classes)
    assert np.allclose(np.asarray(out), out_ref, rtol=2e-3, atol=2e-3)

    # --- training branch (with targets): loss reduction kernel --------------
    loss, lx, ly, lw, lh, lconf, lcls = module.forward(x, targets=targets)
    loss = jax.block_until_ready(loss)
    loss_ref, parts_ref = _loss_reference(np.asarray(x), targets, module)
    assert np.allclose(float(loss), loss_ref, rtol=2e-3, atol=2e-3)
    assert np.allclose(np.array([lx, ly, lw, lh, lconf, lcls]),
                       np.array(parts_ref), rtol=2e-3, atol=2e-3)

    print("KERNEL_OK")
</pallas_src>

<mosaic_0001>
module attributes {stable_mosaic.version = 11 : i64} {
  func.func @_decode_kernel(%arg0: i32, %arg1: i32, %arg2: memref<2x27x128xf32, #tpu.memory_space<vmem>>, %arg3: memref<27x128xf32, #tpu.memory_space<vmem>>, %arg4: memref<27x1xf32, #tpu.memory_space<vmem>>, %arg5: memref<27x1xf32, #tpu.memory_space<vmem>>, %arg6: memref<2x27x128xf32, #tpu.memory_space<vmem>>) attributes {dimension_semantics = [#tpu.dimension_semantics<parallel>, #tpu.dimension_semantics<parallel>], iteration_bounds = array<i64: 1, 1>, scalar_prefetch = 0 : i64, scratch_operands = 0 : i64, tpu.core_type = #tpu.core_type<tc>, window_params = [{transform_indices = @transform_0, window_bounds = array<i64: 2, 27, 128>}, {transform_indices = @transform_1, window_bounds = array<i64: 27, 128>}, {pipeline_mode = #tpu.pipeline_mode<synchronous>, transform_indices = @transform_2, window_bounds = array<i64: 27, 1>}, {pipeline_mode = #tpu.pipeline_mode<synchronous>, transform_indices = @transform_3, window_bounds = array<i64: 27, 1>}, {transform_indices = @transform_4, window_bounds = array<i64: 2, 27, 128>}]} {
    %c0 = arith.constant 0 : index
    %c0_0 = arith.constant 0 : index
    %c0_1 = arith.constant 0 : index
    %0 = vector.load %arg2[%c0, %c0_0, %c0_1] : memref<2x27x128xf32, #tpu.memory_space<vmem>>, vector<2x27x128xf32>
    %c0_2 = arith.constant 0 : index
    %c0_3 = arith.constant 0 : index
    %1 = vector.load %arg3[%c0_2, %c0_3] : memref<27x128xf32, #tpu.memory_space<vmem>>, vector<27x128xf32>
    %c0_4 = arith.constant 0 : index
    %c0_5 = arith.constant 0 : index
    %2 = vector.load %arg4[%c0_4, %c0_5] : memref<27x1xf32, #tpu.memory_space<vmem>>, vector<27x1xf32>
    %c0_6 = arith.constant 0 : index
    %c0_7 = arith.constant 0 : index
    %3 = vector.load %arg5[%c0_6, %c0_7] : memref<27x1xf32, #tpu.memory_space<vmem>>, vector<27x1xf32>
    %cst = arith.constant 5.000000e-01 : f32
    %4 = vector.broadcast %cst : f32 to vector<27x1xf32>
    %5 = arith.cmpf ogt, %3, %4 : vector<27x1xf32>
    %6 = math.exp %0 : vector<2x27x128xf32>
    %7 = arith.negf %0 : vector<2x27x128xf32>
    %8 = math.exp %7 : vector<2x27x128xf32>
    %cst_8 = arith.constant 1.000000e+00 : f32
    %9 = vector.broadcast %cst_8 : f32 to vector<2x27x128xf32>
    %10 = arith.addf %9, %8 : vector<2x27x128xf32>
    %11 = arith.divf %9, %10 : vector<2x27x128xf32>
    %12 = vector.shape_cast %1 : vector<27x128xf32> to vector<1x27x128xf32>
    %13 = vector.broadcast %12 : vector<1x27x128xf32> to vector<2x27x128xf32>
    %14 = arith.addf %11, %13 : vector<2x27x128xf32>
    %15 = vector.shape_cast %5 : vector<27x1xi1> to vector<1x27x1xi1>
    %16 = vector.broadcast %15 : vector<1x27x1xi1> to vector<2x27x128xi1>
    %17 = arith.select %16, %6, %14 : vector<2x27x128xi1>, vector<2x27x128xf32>
    %18 = vector.shape_cast %2 : vector<27x1xf32> to vector<1x27x1xf32>
    %19 = vector.broadcast %18 : vector<1x27x1xf32> to vector<2x27x128xf32>
    %20 = arith.mulf %17, %19 : vector<2x27x128xf32>
    %c0_9 = arith.constant 0 : index
    %c0_10 = arith.constant 0 : index
    %c0_11 = arith.constant 0 : index
    %21 = vector.load %arg6[%c0_9, %c0_10, %c0_11] : memref<2x27x128xf32, #tpu.memory_space<vmem>>, vector<2x27x128xf32>
    tpu.vector_store %arg6[%c0_9, %c0_10, %c0_11], %20 {strides = array<i32>} : memref<2x27x128xf32, #tpu.memory_space<vmem>>, vector<2x27x128xf32>,
    return
  }
  func.func @transform_0(%arg0: i32, %arg1: i32) -> (i32, i32, i32) {
    %c0_i32 = arith.constant 0 : i32
    %c0_i32_0 = arith.constant 0 : i32
    return %arg0, %c0_i32, %arg1 : i32, i32, i32
  }
  func.func @transform_1(%arg0: i32, %arg1: i32) -> (i32, i32) {
    %c0_i32 = arith.constant 0 : i32
    %c0_i32_0 = arith.constant 0 : i32
    return %c0_i32, %arg1 : i32, i32
  }
  func.func @transform_2(%arg0: i32, %arg1: i32) -> (i32, i32) {
    %c0_i32 = arith.constant 0 : i32
    %c0_i32_0 = arith.constant 0 : i32
    %c0_i32_1 = arith.constant 0 : i32
    return %c0_i32, %c0_i32_0 : i32, i32
  }
  func.func @transform_3(%arg0: i32, %arg1: i32) -> (i32, i32) {
    %c0_i32 = arith.constant 0 : i32
    %c0_i32_0 = arith.constant 0 : i32
    %c0_i32_1 = arith.constant 0 : i32
    return %c0_i32, %c0_i32_0 : i32, i32
  }
  func.func @transform_4(%arg0: i32, %arg1: i32) -> (i32, i32, i32) {
    %c0_i32 = arith.constant 0 : i32
    %c0_i32_0 = arith.constant 0 : i32
    return %arg0, %c0_i32, %arg1 : i32, i32, i32
  }
}

</mosaic_0001>

<llo_original>
// kernel: tpu_custom_call.1
$region0: #{tpu_custom_call.1}
  #allocation0 [shape = 'u32[]', space=smem, size = 0x4, offset = 0x4, fixed_abs, tag = 'smem constant byte address 0x4 - core index']
  #allocation1 [shape = 'u32[72,128]{1,0:T(1,128)}', space=vmem, size = 0x9000, scoped, tag = 'internal scratch']
  %s0 = inlined_call_operand.vmem [shape: f32[2,27,128], index: 0, kind: input, shape index: {}]
  %s1 = inlined_call_operand.vmem [shape: f32[27,128], index: 1, kind: input, shape index: {}]
  %s2 = inlined_call_operand.vmem [shape: f32[27,1], index: 2, kind: input, shape index: {}]
  %s3 = inlined_call_operand.vmem [shape: f32[27,1], index: 3, kind: input, shape index: {}]
  %s4 = inlined_call_operand.vmem [shape: f32[2,27,128], index: 4, kind: output, shape index: {}]
  %s5 = sld [smem:[#allocation0]]
  $region26: #{tpu_custom_call.1} parent=0
    _
  %s7 = ssub.s32 1, %s5
  %s8 = scalar_select 0, %s7, %s5
  // Predicated region
  $region2: #{tpu_custom_call.1} parent=0 // pred_check
    _
  $region3: #{tpu_custom_call.1} parent=0 // pred_check_branch
    %10 = sbr.rel (0) target = $region5
  $region4: #{tpu_custom_call.1} parent=0 // pred_region
    _
  $region5: #{tpu_custom_call.1} parent=0 // pred_fallthru
    _
  // Predicated region
  $region6: #{tpu_custom_call.1} parent=0 // pred_check
    _
  $region7: #{tpu_custom_call.1} parent=0 // pred_check_branch
    %12 = sbr.rel (0) target = $region9
  $region8: #{tpu_custom_call.1} parent=0 // pred_region
    _
  $region9: #{tpu_custom_call.1} parent=0 // pred_fallthru
    _
  // Predicated region
  $region10: #{tpu_custom_call.1} parent=0 // pred_check
    _
  $region11: #{tpu_custom_call.1} parent=0 // pred_check_branch
    %14 = sbr.rel (0) target = $region13
  $region12: #{tpu_custom_call.1} parent=0 // pred_region
    _
  $region13: #{tpu_custom_call.1} parent=0 // pred_fallthru
    _
  // Predicated region
  $region14: #{tpu_custom_call.1} parent=0 // pred_check
    _
  $region15: #{tpu_custom_call.1} parent=0 // pred_check_branch
    %16 = sbr.rel (0) target = $region17
  $region16: #{tpu_custom_call.1} parent=0 // pred_region
    _
  $region17: #{tpu_custom_call.1} parent=0 // pred_fallthru
    _
  %v17 = vld [vmem:[%s0] sm:$0xff]
  %v18 = vld [vmem:[%s0 + $0x8] sm:$0xff]
  %v19 = vld [vmem:[%s0 + $0x10] sm:$0xff]
  %v20 = vld [vmem:[%s0 + $0x18] sm:$0x7]
  %v21 = vld [vmem:[%s0 + $0x20] sm:$0xff]
  %v22 = vld [vmem:[%s0 + $0x28] sm:$0xff]
  %v23 = vld [vmem:[%s0 + $0x30] sm:$0xff]
  %v24 = vld [vmem:[%s0 + $0x38] sm:$0x7]
  %v25 = vld [vmem:[%s1] sm:$0xff]
  %v26 = vld [vmem:[%s1 + $0x8] sm:$0xff]
  %v27 = vld [vmem:[%s1 + $0x10] sm:$0xff]
  %v28 = vld [vmem:[%s1 + $0x18] sm:$0x7]
  %v29 = vld [vmem:[%s2] sm:$0xff]
  %v30 = vld [vmem:[%s2 + $0x8] sm:$0xff]
  %v31 = vld [vmem:[%s2 + $0x10] sm:$0xff]
  %v32 = vld [vmem:[%s2 + $0x18] sm:$0x7]
  %v33 = vld [vmem:[%s3] sm:$0xff]
  %v34 = vld [vmem:[%s3 + $0x8] sm:$0xff]
  %v35 = vld [vmem:[%s3 + $0x10] sm:$0xff]
  %v36 = vld [vmem:[%s3 + $0x18] sm:$0x7]
  %vm37 = vcmp.gt.f32.partialorder %v33, 0.5
  %vm38 = vcmp.gt.f32.partialorder %v34, 0.5
  %vm39 = vcmp.gt.f32.partialorder %v35, 0.5
  %vm40 = vcmp.gt.f32.partialorder %v36, 0.5
  %v41 = vmul.f32 %v17, 1.442695
  %v42 = vpow.pop %v41
  %v43 = vmul.f32 %v18, 1.442695
  %v44 = vpow.pop %v43
  %v45 = vmul.f32 %v19, 1.442695
  %v46 = vpow.pop %v45
  %v47 = vmul.f32 %v20, 1.442695
  %v48 = vpow.pop %v47
  %v49 = vmul.f32 %v21, 1.442695
  %v50 = vpow.pop %v49
  %v51 = vmul.f32 %v22, 1.442695
  %v52 = vpow.pop %v51
  %v53 = vmul.f32 %v23, 1.442695
  %v54 = vpow.pop %v53
  %v55 = vmul.f32 %v24, 1.442695
  %v56 = vpow.pop %v55
  %v57 = vxor.u32 %v17, 2147483648
  %v58 = vxor.u32 %v18, 2147483648
  %v59 = vxor.u32 %v19, 2147483648
  %v60 = vxor.u32 %v20, 2147483648
  %v61 = vxor.u32 %v21, 2147483648
  %v62 = vxor.u32 %v22, 2147483648
  %v63 = vxor.u32 %v23, 2147483648
  %v64 = vxor.u32 %v24, 2147483648
  %v65 = vmul.f32 %v57, 1.442695
  %v66 = vpow.pop %v65
  %v67 = vmul.f32 %v58, 1.442695
  %v68 = vpow.pop %v67
  %v69 = vmul.f32 %v59, 1.442695
  %v70 = vpow.pop %v69
  %v71 = vmul.f32 %v60, 1.442695
  %v72 = vpow.pop %v71
  %v73 = vmul.f32 %v61, 1.442695
  %v74 = vpow.pop %v73
  %v75 = vmul.f32 %v62, 1.442695
  %v76 = vpow.pop %v75
  %v77 = vmul.f32 %v63, 1.442695
  %v78 = vpow.pop %v77
  %v79 = vmul.f32 %v64, 1.442695
  %v80 = vpow.pop %v79
  %v81 = vadd.f32 %v66, 1.0
  %v82 = vadd.f32 %v68, 1.0
  %v83 = vadd.f32 %v70, 1.0
  %v84 = vadd.f32 %v72, 1.0
  %v85 = vadd.f32 %v74, 1.0
  %v86 = vadd.f32 %v76, 1.0
  %v87 = vadd.f32 %v78, 1.0
  %v88 = vadd.f32 %v80, 1.0
  %v89 = vrcp.pop %v81
  %v90 = vmul.f32 %v81, %v89
  %v91 = vsub.f32 1.0, %v90
  %v92 = vmul.f32 %v89, %v91
  %v93 = vadd.f32 %v89, %v92
  %vm94 = vweird.f32 %v81
  %vm95 = vweird.f32 %v89
  %vm96 = vmor %vm94, %vm95
  %v97 = vsel %vm96, %v89, %v93
  %v98 = vand.u32 2147483647, %v81
  %vm99 = vcmp.eq.f32.partialorder %v98, 8.507059e+37
  %v100 = vand.u32 %v81, 2147483648
  %v101 = vor.u32 1.1754944e-38, %v100
  %v102 = vsel %vm99, %v101, %v97
  %v103 = vmul.f32 1.0, %v102
  %v104 = vrcp.pop %v82
  %v105 = vmul.f32 %v82, %v104
  %v106 = vsub.f32 1.0, %v105
  %v107 = vmul.f32 %v104, %v106
  %v108 = vadd.f32 %v104, %v107
  %vm109 = vweird.f32 %v82
  %vm110 = vweird.f32 %v104
  %vm111 = vmor %vm109, %vm110
  %v112 = vsel %vm111, %v104, %v108
  %v113 = vand.u32 2147483647, %v82
  %vm114 = vcmp.eq.f32.partialorder %v113, 8.507059e+37
  %v115 = vand.u32 %v82, 2147483648
  %v116 = vor.u32 1.1754944e-38, %v115
  %v117 = vsel %vm114, %v116, %v112
  %v118 = vmul.f32 1.0, %v117
  %v119 = vrcp.pop %v83
  %v120 = vmul.f32 %v83, %v119
  %v121 = vsub.f32 1.0, %v120
  %v122 = vmul.f32 %v119, %v121
  %v123 = vadd.f32 %v119, %v122
  %vm124 = vweird.f32 %v83
  %vm125 = vweird.f32 %v119
  %vm126 = vmor %vm124, %vm125
  %v127 = vsel %vm126, %v119, %v123
  %v128 = vand.u32 2147483647, %v83
  %vm129 = vcmp.eq.f32.partialorder %v128, 8.507059e+37
  %v130 = vand.u32 %v83, 2147483648
  %v131 = vor.u32 1.1754944e-38, %v130
  %v132 = vsel %vm129, %v131, %v127
  %v133 = vmul.f32 1.0, %v132
  %v134 = vrcp.pop %v84
  %v135 = vmul.f32 %v84, %v134
  %v136 = vsub.f32 1.0, %v135
  %v137 = vmul.f32 %v134, %v136
  %v138 = vadd.f32 %v134, %v137
  %vm139 = vweird.f32 %v84
  %vm140 = vweird.f32 %v134
  %vm141 = vmor %vm139, %vm140
  %v142 = vsel %vm141, %v134, %v138
  %v143 = vand.u32 2147483647, %v84
  %vm144 = vcmp.eq.f32.partialorder %v143, 8.507059e+37
  %v145 = vand.u32 %v84, 2147483648
  %v146 = vor.u32 1.1754944e-38, %v145
  %v147 = vsel %vm144, %v146, %v142
  %v148 = vmul.f32 1.0, %v147
  %v149 = vrcp.pop %v85
  %v150 = vmul.f32 %v85, %v149
  %v151 = vsub.f32 1.0, %v150
  %v152 = vmul.f32 %v149, %v151
  %v153 = vadd.f32 %v149, %v152
  %vm154 = vweird.f32 %v85
  %vm155 = vweird.f32 %v149
  %vm156 = vmor %vm154, %vm155
  %v157 = vsel %vm156, %v149, %v153
  %v158 = vand.u32 2147483647, %v85
  %vm159 = vcmp.eq.f32.partialorder %v158, 8.507059e+37
  %v160 = vand.u32 %v85, 2147483648
  %v161 = vor.u32 1.1754944e-38, %v160
  %v162 = vsel %vm159, %v161, %v157
  %v163 = vmul.f32 1.0, %v162
  %v164 = vrcp.pop %v86
  %v165 = vmul.f32 %v86, %v164
  %v166 = vsub.f32 1.0, %v165
  %v167 = vmul.f32 %v164, %v166
  %v168 = vadd.f32 %v164, %v167
  %vm169 = vweird.f32 %v86
  %vm170 = vweird.f32 %v164
  %vm171 = vmor %vm169, %vm170
  %v172 = vsel %vm171, %v164, %v168
  %v173 = vand.u32 2147483647, %v86
  %vm174 = vcmp.eq.f32.partialorder %v173, 8.507059e+37
  %v175 = vand.u32 %v86, 2147483648
  %v176 = vor.u32 1.1754944e-38, %v175
  %v177 = vsel %vm174, %v176, %v172
  %v178 = vmul.f32 1.0, %v177
  %v179 = vrcp.pop %v87
  %v180 = vmul.f32 %v87, %v179
  %v181 = vsub.f32 1.0, %v180
  %v182 = vmul.f32 %v179, %v181
  %v183 = vadd.f32 %v179, %v182
  %vm184 = vweird.f32 %v87
  %vm185 = vweird.f32 %v179
  %vm186 = vmor %vm184, %vm185
  %v187 = vsel %vm186, %v179, %v183
  %v188 = vand.u32 2147483647, %v87
  %vm189 = vcmp.eq.f32.partialorder %v188, 8.507059e+37
  %v190 = vand.u32 %v87, 2147483648
  %v191 = vor.u32 1.1754944e-38, %v190
  %v192 = vsel %vm189, %v191, %v187
  %v193 = vmul.f32 1.0, %v192
  %v194 = vrcp.pop %v88
  %v195 = vmul.f32 %v88, %v194
  %v196 = vsub.f32 1.0, %v195
  %v197 = vmul.f32 %v194, %v196
  %v198 = vadd.f32 %v194, %v197
  %vm199 = vweird.f32 %v88
  %vm200 = vweird.f32 %v194
  %vm201 = vmor %vm199, %vm200
  %v202 = vsel %vm201, %v194, %v198
  %v203 = vand.u32 2147483647, %v88
  %vm204 = vcmp.eq.f32.partialorder %v203, 8.507059e+37
  %v205 = vand.u32 %v88, 2147483648
  %v206 = vor.u32 1.1754944e-38, %v205
  %v207 = vsel %vm204, %v206, %v202
  %v208 = vmul.f32 1.0, %v207
  %v209 = vadd.f32 %v103, %v25
  %v210 = vadd.f32 %v118, %v26
  %v211 = vadd.f32 %v133, %v27
  %v212 = vadd.f32 %v148, %v28
  %v213 = vadd.f32 %v163, %v25
  %v214 = vadd.f32 %v178, %v26
  %v215 = vadd.f32 %v193, %v27
  %v216 = vadd.f32 %v208, %v28
  %v217 = vsel %vm37, 1, 0
  %v218 = vsel %vm38, 1, 0
  %v219 = vsel %vm39, 1, 0
  %v220 = vsel %vm40, 1, 0
  %221 = vset.pattern.permute.xlu0 0
  %222 = vperm.xlu0 %221, %v217
  %v223 = vpop.permute.xlu0 %222
  %224 = vset.pattern.permute.xlu0 0
  %225 = vperm.xlu0 %224, %v218
  %v226 = vpop.permute.xlu0 %225
  %227 = vset.pattern.permute.xlu0 0
  %228 = vperm.xlu0 %227, %v219
  %v229 = vpop.permute.xlu0 %228
  %230 = vset.pattern.permute.xlu0 0
  %231 = vperm.xlu0 %230, %v220
  %v232 = vpop.permute.xlu0 %231
  %vm233 = vcmp.eq.s32.totalorder %v223, 1
  %vm234 = vcmp.eq.s32.totalorder %v226, 1
  %vm235 = vcmp.eq.s32.totalorder %v229, 1
  %vm236 = vcmp.eq.s32.totalorder %v232, 1
  %v237 = vsel %vm233, %v42, %v209
  %v238 = vsel %vm234, %v44, %v210
  %v239 = vsel %vm235, %v46, %v211
  %v240 = vsel %vm236, %v48, %v212
  %v241 = vsel %vm233, %v50, %v213
  %v242 = vsel %vm234, %v52, %v214
  %v243 = vsel %vm235, %v54, %v215
  %v244 = vsel %vm236, %v56, %v216
  %246 = vset.pattern.permute.xlu0 0
  %247 = vperm.xlu0 %246, %v29
  %v248 = vpop.permute.xlu0 %247
  %251 = vset.pattern.permute.xlu0 0
  %252 = vperm.xlu0 %251, %v30
  %v253 = vpop.permute.xlu0 %252
  %256 = vset.pattern.permute.xlu0 0
  %257 = vperm.xlu0 %256, %v31
  %v258 = vpop.permute.xlu0 %257
  %261 = vset.pattern.permute.xlu0 0
  %262 = vperm.xlu0 %261, %v32
  %v263 = vpop.permute.xlu0 %262
  %v265 = vmul.f32 %v237, %v248
  %v266 = vmul.f32 %v238, %v253
  %v267 = vmul.f32 %v239, %v258
  %v268 = vmul.f32 %v240, %v263
  %v269 = vmul.f32 %v241, %v248
  %v270 = vmul.f32 %v242, %v253
  %v271 = vmul.f32 %v243, %v258
  %v272 = vmul.f32 %v244, %v263
  %273 = vst [vmem:[%s4] sm:$0xff] %v265
  %274 = vst [vmem:[%s4 + $0x8] sm:$0xff] %v266
  %275 = vst [vmem:[%s4 + $0x10] sm:$0xff] %v267
  %276 = vst [vmem:[%s4 + $0x18] sm:$0x7] %v268
  %277 = vst [vmem:[%s4 + $0x20] sm:$0xff] %v269
  %278 = vst [vmem:[%s4 + $0x28] sm:$0xff] %v270
  %279 = vst [vmem:[%s4 + $0x30] sm:$0xff] %v271
  %280 = vst [vmem:[%s4 + $0x38] sm:$0x7] %v272
  // Predicated region
  $region18: #{tpu_custom_call.1} parent=0 // pred_check
    _
  $region19: #{tpu_custom_call.1} parent=0 // pred_check_branch
    %282 = sbr.rel (0) target = $region21
  $region20: #{tpu_custom_call.1} parent=0 // pred_region
    _
  $region21: #{tpu_custom_call.1} parent=0 // pred_fallthru
    _
  // Predicated region
  $region22: #{tpu_custom_call.1} parent=0 // pred_check
    _
  $region23: #{tpu_custom_call.1} parent=0 // pred_check_branch
    %284 = sbr.rel (0) target = $region25
  $region24: #{tpu_custom_call.1} parent=0 // pred_region
    _
  $region25: #{tpu_custom_call.1} parent=0 // pred_fallthru
    _

</llo_original>
